<compile_context>
chip_gen: v5e
topology: v5e:2x2
jax: 0.10.0
libtpu: 0.0.40
codegen_flags: <defaults>
</compile_context>

<pallas_src>
import functools

import jax
import jax.numpy as jnp
from jax.experimental import pallas as pl
from jax.experimental.pallas import tpu as pltpu

_NEG_INF = -1e30


def _cdiv(a, b):
    return (a + b - 1) // b


def _round_up(x, m):
    return (x + m - 1) // m * m


def _flash_sdpa_kernel(q_ref, k_ref, v_ref, o_ref, m_sc, l_sc, acc_sc, qs_sc, *,
                       q_scale, lk, tk, mask_k, compute_dtype):
    kv = pl.program_id(2)

    @pl.when(kv == 0)
    def _init():
        m_sc[...] = jnp.full_like(m_sc, _NEG_INF)
        l_sc[...] = jnp.zeros_like(l_sc)
        acc_sc[...] = jnp.zeros_like(acc_sc)
        # The Q block is resident across the kv axis (same block index every kv step),
        # so the scale multiply / dtype cast happens ONCE per q-tile here instead of
        # being re-executed Lk/tk times inside the kv loop.
        q = q_ref[0]
        if q_scale is not None:
            q = q.astype(jnp.float32) * q_scale
        qs_sc[...] = q.astype(compute_dtype)

    q = qs_sc[...]                        # (tq, D), pre-scaled
    k = k_ref[0].astype(compute_dtype)    # (tk, D)
    v = v_ref[0]                          # (tk, Dv)

    # scores = (Q*scale) @ K^T, contracting over D without materializing K^T.
    s = jax.lax.dot_general(
        q, k, dimension_numbers=(((1,), (1,)), ((), ())),
        preferred_element_type=jnp.float32)             # (tq, tk) f32

    if mask_k:
        # Only the trailing kv tile extends past Lk. Its out-of-bounds block contents
        # are unspecified, so mask the scores AND zero the OOB V rows (0 * NaN would
        # otherwise contaminate valid rows of the accumulator).
        rem = lk - kv * tk                               # #valid keys in this tile
        col = jax.lax.broadcasted_iota(jnp.int32, s.shape, 1)
        s = jnp.where(col < rem, s, _NEG_INF)
        row = jax.lax.broadcasted_iota(jnp.int32, v.shape, 0)
        v = jnp.where(row < rem, v, 0)

    v = v.astype(compute_dtype)

    # Online softmax update, running stats kept in f32.
    # (m_sc/l_sc are (tq, 1); they pad to a lane anyway — kept narrow so exp/EUP work
    #  stays O(tq) per step, not O(tq*128).)
    m_prev = m_sc[...]
    m_new = jnp.maximum(m_prev, jnp.max(s, axis=-1, keepdims=True))
    alpha = jnp.exp(m_prev - m_new)
    p = jnp.exp(s - m_new)
    l_sc[...] = alpha * l_sc[...] + jnp.sum(p, axis=-1, keepdims=True)
    acc_sc[...] = alpha * acc_sc[...] + jnp.dot(
        p.astype(compute_dtype), v, preferred_element_type=jnp.float32)
    m_sc[...] = m_new

    @pl.when(kv == pl.num_programs(2) - 1)
    def _finalize():
        # Exact reciprocal: runs once per q-tile, negligible cost, tighter accuracy.
        inv_l = pl.reciprocal(l_sc[...], approx=False)
        o_ref[0] = (acc_sc[...] * inv_l).astype(o_ref.dtype)


def _kv_block_spec(block_shape, index_map, deeper):
    """K/V BlockSpec, with 3-deep pipelining when it is likely to pay off."""
    if deeper and hasattr(pl, "Buffered"):
        try:
            return pl.BlockSpec(block_shape, index_map, pipeline_mode=pl.Buffered(3))
        except TypeError:   # older jax without pipeline_mode: silently fall back
            pass
    return pl.BlockSpec(block_shape, index_map)


def scaled_dot_product_attention(Q, K, V, scale=None, *, block_q=512, block_k=512,
                                 bf16_matmul=False):
    """Pallas TPU equivalent of PyTorch Scaled_Dot_Product_Attention.forward.

    Q: [B, Lq, D], K: [B, Lk, D], V: [B, Lk, Dv] -> context: [B, Lq, Dv]

    Notes:
      * `scale` follows PyTorch truthiness: scale=None or scale=0.0 means NO scaling.
      * `bf16_matmul=True` runs both matmuls in bf16 with f32 accumulation (recommended
        for f32 inputs on v6e/v7x when MXU-bound; opt-in because it relaxes precision).
      * `block_k` is the per-generation knob: keep it at 256-512 on v5e, larger on v6e/v7x.
    """
    B, Lq, D = Q.shape
    Bk, Lk, Dk = K.shape
    Bv, Lv, Dv = V.shape
    assert B == Bk == Bv and D == Dk and Lk == Lv
    assert block_q % 8 == 0 and block_k % 8 == 0

    # Match PyTorch `if scale:` truthiness.
    q_scale = float(scale) if scale else None

    in_dtype = jnp.dtype(Q.dtype)
    if in_dtype in (jnp.dtype(jnp.bfloat16), jnp.dtype(jnp.float16)):
        compute_dtype = in_dtype            # already a native MXU dtype
    elif bf16_matmul:
        compute_dtype = jnp.bfloat16        # opt-in fast MXU path for f32 inputs
    else:
        compute_dtype = jnp.float32

    # Tile selection — no wrapper-side padding passes:
    #   * D / Dv always use full-extent blocks (legal regardless of 128-divisibility),
    #   * length tiles are either the full length (legal as "equal to dim") or a
    #     multiple of 8; the trailing partial kv tile is masked inside the kernel.
    tq = Lq if Lq <= block_q else block_q
    tk = Lk if Lk <= block_k else block_k
    # v7x has 2 TensorCores sharded over the "parallel" axes: keep >=2 grid units.
    if B * _cdiv(Lq, tq) < 2 and Lq >= 16:
        tq = _round_up(_cdiv(Lq, 2), 8)

    n_q = _cdiv(Lq, tq)
    n_kv = _cdiv(Lk, tk)
    mask_k = (Lk % tk) != 0
    grid = (B, n_q, n_kv)

    # Deeper K/V buffering when per-tile compute is short (small D) or inputs are bf16.
    deeper_kv = (D <= 64 or in_dtype == jnp.dtype(jnp.bfloat16)) and n_kv >= 3

    kernel = functools.partial(
        _flash_sdpa_kernel, q_scale=q_scale, lk=Lk, tk=tk, mask_k=mask_k,
        compute_dtype=compute_dtype)

    # Truthful HBM-traffic estimate: K and V are re-streamed once per q-tile.
    bytes_in = in_dtype.itemsize
    cost = pl.CostEstimate(
        flops=int(2 * B * Lq * Lk * (D + Dv)),
        transcendentals=int(B * Lq * Lk),
        bytes_accessed=int(bytes_in * (Q.size + (K.size + V.size) * n_q)
                           + bytes_in * B * Lq * Dv),
    )

    return pl.pallas_call(
        kernel,
        out_shape=jax.ShapeDtypeStruct((B, Lq, Dv), Q.dtype),
        grid_spec=pltpu.PrefetchScalarGridSpec(
            num_scalar_prefetch=0,
            grid=grid,
            in_specs=[
                pl.BlockSpec((1, tq, D), lambda b, qi, ki: (b, qi, 0)),
                _kv_block_spec((1, tk, D), lambda b, qi, ki: (b, ki, 0), deeper_kv),
                _kv_block_spec((1, tk, Dv), lambda b, qi, ki: (b, ki, 0), deeper_kv),
            ],
            out_specs=pl.BlockSpec((1, tq, Dv), lambda b, qi, ki: (b, qi, 0)),
            scratch_shapes=[
                pltpu.VMEM((tq, 1), jnp.float32),      # running max m
                pltpu.VMEM((tq, 1), jnp.float32),      # running denom l
                pltpu.VMEM((tq, Dv), jnp.float32),     # output accumulator
                pltpu.VMEM((tq, D), compute_dtype),    # pre-scaled Q (once per q-tile)
            ],
        ),
        compiler_params=pltpu.CompilerParams(
            dimension_semantics=("parallel", "parallel", "arbitrary"),
            # A few MiB suffice; 48 MiB leaves headroom even on v7x (64 MiB / TC).
            vmem_limit_bytes=48 * 1024 * 1024,
        ),
        cost_estimate=cost,
    )(Q, K, V)


def _reference(Q, K, V, scale=None):
    scores = jnp.einsum("bqd,bkd->bqk", Q, K)
    if scale:
        scores = scores * scale
    attn = jax.nn.softmax(scores, axis=-1)
    return jnp.einsum("bqk,bkv->bqv", attn, V)


if __name__ == "__main__":
    key = jax.random.PRNGKey(0)
    kq, kk, kv = jax.random.split(key, 3)

    # Small shapes matching the module's [batch, len, dim] convention.
    B, Lq, Lk, D, Dv = 2, 8, 8, 32, 32
    Q = jax.random.normal(kq, (B, Lq, D), dtype=jnp.float32)
    K = jax.random.normal(kk, (B, Lk, D), dtype=jnp.float32)
    V = jax.random.normal(kv, (B, Lk, Dv), dtype=jnp.float32)
    scale = 1.0 / (D ** 0.5)  # "论文为根号dim_K"

    out = jax.block_until_ready(scaled_dot_product_attention(Q, K, V, scale=scale))
    ref = _reference(Q, K, V, scale=scale)
    assert out.shape == (B, Lq, Dv)
    assert jnp.allclose(out, ref, atol=2e-3, rtol=2e-3), "mismatch vs reference (small)"

    # Multi-tile kv loop + partial trailing q/kv tiles (in-kernel masking, no padding).
    B2, Lq2, Lk2, D2, Dv2 = 2, 24, 200, 48, 96
    k2q, k2k, k2v = jax.random.split(jax.random.PRNGKey(1), 3)
    Q2 = jax.random.normal(k2q, (B2, Lq2, D2), dtype=jnp.float32)
    K2 = jax.random.normal(k2k, (B2, Lk2, D2), dtype=jnp.float32)
    V2 = jax.random.normal(k2v, (B2, Lk2, Dv2), dtype=jnp.float32)
    s2 = 1.0 / (D2 ** 0.5)
    out2 = jax.block_until_ready(
        scaled_dot_product_attention(Q2, K2, V2, scale=s2, block_q=16, block_k=128))
    ref2 = _reference(Q2, K2, V2, scale=s2)
    assert out2.shape == (B2, Lq2, Dv2)
    assert jnp.allclose(out2, ref2, atol=2e-3, rtol=2e-3), "mismatch (tiled/masked)"

    # Opt-in bf16 MXU path (relaxed tolerance) + deeper K/V pipelining (n_kv >= 3).
    out3 = jax.block_until_ready(
        scaled_dot_product_attention(Q2, K2, V2, scale=s2, block_q=16, block_k=64,
                                     bf16_matmul=True))
    assert out3.shape == (B2, Lq2, Dv2)
    assert jnp.allclose(out3, ref2, atol=3e-2, rtol=3e-2), "mismatch (bf16 matmul path)"

    print("KERNEL_OK")
</pallas_src>

<mosaic_0001>
module attributes {stable_mosaic.version = 11 : i64} {
  func.func @_flash_sdpa_kernel(%arg0: i32, %arg1: i32, %arg2: i32, %arg3: memref<1x8x32xf32, #tpu.memory_space<vmem>>, %arg4: memref<1x8x32xf32, #tpu.memory_space<vmem>>, %arg5: memref<1x8x32xf32, #tpu.memory_space<vmem>>, %arg6: memref<1x8x32xf32, #tpu.memory_space<vmem>>, %arg7: memref<8x1xf32, #tpu.memory_space<vmem>>, %arg8: memref<8x1xf32, #tpu.memory_space<vmem>>, %arg9: memref<8x32xf32, #tpu.memory_space<vmem>>, %arg10: memref<8x32xf32, #tpu.memory_space<vmem>>) attributes {dimension_semantics = [#tpu.dimension_semantics<parallel>, #tpu.dimension_semantics<parallel>, #tpu.dimension_semantics<arbitrary>], iteration_bounds = array<i64: 2, 1, 1>, scalar_prefetch = 0 : i64, scratch_operands = 4 : i64, tpu.core_type = #tpu.core_type<tc>, window_params = [{transform_indices = @transform_0, window_bounds = array<i64: 1, 8, 32>}, {transform_indices = @transform_1, window_bounds = array<i64: 1, 8, 32>}, {transform_indices = @transform_2, window_bounds = array<i64: 1, 8, 32>}, {transform_indices = @transform_3, window_bounds = array<i64: 1, 8, 32>}]} {
    %c0_i32 = arith.constant 0 : i32
    %0 = arith.cmpi eq, %arg2, %c0_i32 : i32
    %1 = arith.extui %0 : i1 to i32
    %c0_i32_0 = arith.constant 0 : i32
    %2 = arith.cmpi ne, %1, %c0_i32_0 : i32
    scf.if %2 {
      %cst_25 = arith.constant -1.000000e+30 : f32
      %34 = vector.broadcast %cst_25 : f32 to vector<8x1xf32>
      %c0_26 = arith.constant 0 : index
      %c0_27 = arith.constant 0 : index
      %35 = vector.load %arg7[%c0_26, %c0_27] : memref<8x1xf32, #tpu.memory_space<vmem>>, vector<8x1xf32>
      tpu.vector_store %arg7[%c0_26, %c0_27], %34 {strides = array<i32>} : memref<8x1xf32, #tpu.memory_space<vmem>>, vector<8x1xf32>,
      %cst_28 = arith.constant 0.000000e+00 : f32
      %36 = vector.broadcast %cst_28 : f32 to vector<8x1xf32>
      %c0_29 = arith.constant 0 : index
      %c0_30 = arith.constant 0 : index
      %37 = vector.load %arg8[%c0_29, %c0_30] : memref<8x1xf32, #tpu.memory_space<vmem>>, vector<8x1xf32>
      tpu.vector_store %arg8[%c0_29, %c0_30], %36 {strides = array<i32>} : memref<8x1xf32, #tpu.memory_space<vmem>>, vector<8x1xf32>,
      %cst_31 = arith.constant 0.000000e+00 : f32
      %38 = vector.broadcast %cst_31 : f32 to vector<8x32xf32>
      %c0_32 = arith.constant 0 : index
      %c0_33 = arith.constant 0 : index
      %39 = vector.load %arg9[%c0_32, %c0_33] : memref<8x32xf32, #tpu.memory_space<vmem>>, vector<8x32xf32>
      tpu.vector_store %arg9[%c0_32, %c0_33], %38 {strides = array<i32>} : memref<8x32xf32, #tpu.memory_space<vmem>>, vector<8x32xf32>,
      %c0_34 = arith.constant 0 : index
      %c0_35 = arith.constant 0 : index
      %c0_36 = arith.constant 0 : index
      %40 = vector.load %arg3[%c0_34, %c0_35, %c0_36] : memref<1x8x32xf32, #tpu.memory_space<vmem>>, vector<1x8x32xf32>
      %41 = vector.shape_cast %40 : vector<1x8x32xf32> to vector<8x32xf32>
      %cst_37 = arith.constant 0.176776692 : f32
      %42 = vector.broadcast %cst_37 : f32 to vector<8x32xf32>
      %43 = arith.mulf %41, %42 : vector<8x32xf32>
      %c0_38 = arith.constant 0 : index
      %c0_39 = arith.constant 0 : index
      %44 = vector.load %arg10[%c0_38, %c0_39] : memref<8x32xf32, #tpu.memory_space<vmem>>, vector<8x32xf32>
      tpu.vector_store %arg10[%c0_38, %c0_39], %43 {strides = array<i32>} : memref<8x32xf32, #tpu.memory_space<vmem>>, vector<8x32xf32>,
    } else {
    }
    %c0 = arith.constant 0 : index
    %c0_1 = arith.constant 0 : index
    %3 = vector.load %arg10[%c0, %c0_1] : memref<8x32xf32, #tpu.memory_space<vmem>>, vector<8x32xf32>
    %c0_2 = arith.constant 0 : index
    %c0_3 = arith.constant 0 : index
    %c0_4 = arith.constant 0 : index
    %4 = vector.load %arg4[%c0_2, %c0_3, %c0_4] : memref<1x8x32xf32, #tpu.memory_space<vmem>>, vector<1x8x32xf32>
    %5 = vector.shape_cast %4 : vector<1x8x32xf32> to vector<8x32xf32>
    %c0_5 = arith.constant 0 : index
    %c0_6 = arith.constant 0 : index
    %c0_7 = arith.constant 0 : index
    %6 = vector.load %arg5[%c0_5, %c0_6, %c0_7] : memref<1x8x32xf32, #tpu.memory_space<vmem>>, vector<1x8x32xf32>
    %7 = vector.shape_cast %6 : vector<1x8x32xf32> to vector<8x32xf32>
    %cst = arith.constant dense<0.000000e+00> : vector<8x8xf32>
    %8 = tpu.matmul %3, %5, %cst {dimension_numbers = #tpu.dot_dimension_numbers<[1], [1], [0], [0], [0, 0, 1, 0], [], []>} : vector<8x32xf32>, vector<8x32xf32>, vector<8x8xf32> -> vector<8x8xf32>
    %c0_8 = arith.constant 0 : index
    %c0_9 = arith.constant 0 : index
    %9 = vector.load %arg7[%c0_8, %c0_9] : memref<8x1xf32, #tpu.memory_space<vmem>>, vector<8x1xf32>
    %cst_10 = arith.constant dense<0xFF800000> : vector<8xf32>
    %10 = vector.multi_reduction <maximumf>, %8, %cst_10 [1] : vector<8x8xf32> to vector<8xf32>
    %11 = vector.shape_cast %10 : vector<8xf32> to vector<8x1xf32>
    %12 = arith.maximumf %9, %11 : vector<8x1xf32>
    %13 = arith.subf %9, %12 : vector<8x1xf32>
    %14 = math.exp %13 : vector<8x1xf32>
    %15 = vector.broadcast %12 : vector<8x1xf32> to vector<8x8xf32>
    %16 = arith.subf %8, %15 : vector<8x8xf32>
    %17 = math.exp %16 : vector<8x8xf32>
    %c0_11 = arith.constant 0 : index
    %c0_12 = arith.constant 0 : index
    %18 = vector.load %arg8[%c0_11, %c0_12] : memref<8x1xf32, #tpu.memory_space<vmem>>, vector<8x1xf32>
    %19 = arith.mulf %14, %18 : vector<8x1xf32>
    %cst_13 = arith.constant dense<0.000000e+00> : vector<8xf32>
    %20 = vector.multi_reduction <add>, %17, %cst_13 [1] : vector<8x8xf32> to vector<8xf32>
    %21 = vector.shape_cast %20 : vector<8xf32> to vector<8x1xf32>
    %22 = arith.addf %19, %21 : vector<8x1xf32>
    %c0_14 = arith.constant 0 : index
    %c0_15 = arith.constant 0 : index
    %23 = vector.load %arg8[%c0_14, %c0_15] : memref<8x1xf32, #tpu.memory_space<vmem>>, vector<8x1xf32>
    tpu.vector_store %arg8[%c0_14, %c0_15], %22 {strides = array<i32>} : memref<8x1xf32, #tpu.memory_space<vmem>>, vector<8x1xf32>,
    %c0_16 = arith.constant 0 : index
    %c0_17 = arith.constant 0 : index
    %24 = vector.load %arg9[%c0_16, %c0_17] : memref<8x32xf32, #tpu.memory_space<vmem>>, vector<8x32xf32>
    %25 = vector.broadcast %14 : vector<8x1xf32> to vector<8x32xf32>
    %26 = arith.mulf %25, %24 : vector<8x32xf32>
    %cst_18 = arith.constant dense<0.000000e+00> : vector<8x32xf32>
    %27 = tpu.matmul %17, %7, %cst_18 {dimension_numbers = #tpu.dot_dimension_numbers<[1], [0], [0], [1], [0, 0, 1, 1], [], []>} : vector<8x8xf32>, vector<8x32xf32>, vector<8x32xf32> -> vector<8x32xf32>
    %28 = arith.addf %26, %27 : vector<8x32xf32>
    %c0_19 = arith.constant 0 : index
    %c0_20 = arith.constant 0 : index
    %29 = vector.load %arg9[%c0_19, %c0_20] : memref<8x32xf32, #tpu.memory_space<vmem>>, vector<8x32xf32>
    tpu.vector_store %arg9[%c0_19, %c0_20], %28 {strides = array<i32>} : memref<8x32xf32, #tpu.memory_space<vmem>>, vector<8x32xf32>,
    %c0_21 = arith.constant 0 : index
    %c0_22 = arith.constant 0 : index
    %30 = vector.load %arg7[%c0_21, %c0_22] : memref<8x1xf32, #tpu.memory_space<vmem>>, vector<8x1xf32>
    tpu.vector_store %arg7[%c0_21, %c0_22], %12 {strides = array<i32>} : memref<8x1xf32, #tpu.memory_space<vmem>>, vector<8x1xf32>,
    %c0_i32_23 = arith.constant 0 : i32
    %31 = arith.cmpi eq, %arg2, %c0_i32_23 : i32
    %32 = arith.extui %31 : i1 to i32
    %c0_i32_24 = arith.constant 0 : i32
    %33 = arith.cmpi ne, %32, %c0_i32_24 : i32
    scf.if %33 {
      %c0_25 = arith.constant 0 : index
      %c0_26 = arith.constant 0 : index
      %34 = vector.load %arg8[%c0_25, %c0_26] : memref<8x1xf32, #tpu.memory_space<vmem>>, vector<8x1xf32>
      %35 = tpu.reciprocal %34 : vector<8x1xf32> -> vector<8x1xf32>
      %c0_27 = arith.constant 0 : index
      %c0_28 = arith.constant 0 : index
      %36 = vector.load %arg9[%c0_27, %c0_28] : memref<8x32xf32, #tpu.memory_space<vmem>>, vector<8x32xf32>
      %37 = vector.broadcast %35 : vector<8x1xf32> to vector<8x32xf32>
      %38 = arith.mulf %36, %37 : vector<8x32xf32>
      %c0_29 = arith.constant 0 : index
      %c0_30 = arith.constant 0 : index
      %c0_31 = arith.constant 0 : index
      %39 = vector.load %arg6[%c0_29, %c0_30, %c0_31] : memref<1x8x32xf32, #tpu.memory_space<vmem>>, vector<1x8x32xf32>
      %40 = vector.shape_cast %39 : vector<1x8x32xf32> to vector<8x32xf32>
      %41 = vector.shape_cast %38 : vector<8x32xf32> to vector<1x8x32xf32>
      tpu.vector_store %arg6[%c0_29, %c0_30, %c0_31], %41 {strides = array<i32>} : memref<1x8x32xf32, #tpu.memory_space<vmem>>, vector<1x8x32xf32>,
    } else {
    }
    return
  }
  func.func @transform_0(%arg0: i32, %arg1: i32, %arg2: i32) -> (i32, i32, i32) {
    %c0_i32 = arith.constant 0 : i32
    %c0_i32_0 = arith.constant 0 : i32
    return %arg0, %arg1, %c0_i32 : i32, i32, i32
  }
  func.func @transform_1(%arg0: i32, %arg1: i32, %arg2: i32) -> (i32, i32, i32) {
    %c0_i32 = arith.constant 0 : i32
    %c0_i32_0 = arith.constant 0 : i32
    return %arg0, %arg2, %c0_i32 : i32, i32, i32
  }
  func.func @transform_2(%arg0: i32, %arg1: i32, %arg2: i32) -> (i32, i32, i32) {
    %c0_i32 = arith.constant 0 : i32
    %c0_i32_0 = arith.constant 0 : i32
    return %arg0, %arg2, %c0_i32 : i32, i32, i32
  }
  func.func @transform_3(%arg0: i32, %arg1: i32, %arg2: i32) -> (i32, i32, i32) {
    %c0_i32 = arith.constant 0 : i32
    %c0_i32_0 = arith.constant 0 : i32
    return %arg0, %arg1, %c0_i32 : i32, i32, i32
  }
}

</mosaic_0001>

<llo_original>
// kernel: tpu_custom_call.1
$region0: #{tpu_custom_call.1}
  #allocation0 [shape = 'u32[]', space=smem, size = 0x4, offset = 0x4, fixed_abs, tag = 'smem constant byte address 0x4 - core index']
  #allocation1 [shape = 'u32[72,128]{1,0:T(1,128)}', space=vmem, size = 0x9000, scoped, tag = 'internal scratch']
  #allocation2 [shape = 'f32[8,1]{1,0:T(8,128)}', space=vmem, size = 0x1000, scoped, tag = 'scratch operand']
  #allocation3 [shape = 'f32[8,1]{1,0:T(8,128)}', space=vmem, size = 0x1000, scoped, tag = 'scratch operand']
  #allocation4 [shape = 'f32[8,32]{1,0:T(8,128)}', space=vmem, size = 0x1000, scoped, tag = 'scratch operand']
  #allocation5 [shape = 'f32[8,32]{1,0:T(8,128)}', space=vmem, size = 0x1000, scoped, tag = 'scratch operand']
  %s0 = inlined_call_operand.hbm [shape: f32[2,8,32], index: 0, kind: input, shape index: {}]
  %s1 = inlined_call_operand.hbm [shape: f32[2,8,32], index: 1, kind: input, shape index: {}]
  %s2 = inlined_call_operand.hbm [shape: f32[2,8,32], index: 2, kind: input, shape index: {}]
  %s3 = inlined_call_operand.hbm [shape: f32[2,8,32], index: 3, kind: output, shape index: {}]
  %s4 = sld [smem:[#allocation0]]
  $region65: #{tpu_custom_call.1} parent=0
    _
  %s6 = ssub.s32 1, %s4
  %s7 = scalar_select 0, %s6, %s4
  $region1: #{tpu_custom_call.1} parent=0
    #allocation6 [shape = 'u8[8192]{0}', space=vmem, size = 0x2000, scoped, tag = 'input window, operand 0']
    #allocation7 [shape = 's32[2]{0}', space=sflag, size = 0x8, scoped, tag = 'scoped memory for tpu_custom_call.1']
    #allocation8 [shape = 's32[2]{0}', space=sflag, size = 0x8, scoped, tag = 'scoped memory for tpu_custom_call.1']
    #allocation9 [shape = 'u8[8192]{0}', space=vmem, size = 0x2000, scoped, tag = 'input window, operand 1']
    #allocation10 [shape = 's32[2]{0}', space=sflag, size = 0x8, scoped, tag = 'scoped memory for tpu_custom_call.1']
    #allocation11 [shape = 'u8[8192]{0}', space=vmem, size = 0x2000, scoped, tag = 'input window, operand 2']
    #allocation12 [shape = 'u8[8192]{0}', space=vmem, size = 0x2000, scoped, tag = 'output window, operand 0']
    %8 = vsyncpa [#allocation7], 0
    %s9 = scalar_lea.sflag [#allocation7], 1
    %10 = vsyncpa %s9, 0
    %11 = vsyncpa [#allocation10], 0
    %s12 = scalar_lea.sflag [#allocation10], 1
    %13 = vsyncpa %s12, 0
    %14 = vsyncpa [#allocation8], 0
    %s15 = scalar_lea.sflag [#allocation8], 1
    %16 = vsyncpa %s15, 0
    loop: start=0, step=1, limit=4
    $region2: #{tpu_custom_call.1} parent=1 // loop_pre_header
      _
    $region3: #{tpu_custom_call.1} parent=1 // loop_header
      %s18 = sphi 0, %s22
      %p19 = scmp.ge.s32.totalorder %s18, 4
      %s25 = sphi 0, %s44
      %s26 = sphi 0, %s40
      %s27 = sphi 0, %s36
      %s28 = sphi 0, %s25
      %s29 = sphi 0, %s26
      %s30 = sphi 0, %s27
      %s31 = sphi 0, %s28
      %s32 = sphi 0, %s29
      %s33 = sphi 0, %s30
      %s49 = sphi 0, %s51
      %s52 = sphi 0, %s49
      %s53 = sphi 0, %s52
      %s69 = sphi 0, %s53
      %s77 = sphi 0, %s79
      %s80 = sphi 0, %s77
      %s81 = sphi 0, %s80
      %s97 = sphi 0, %s81
      %s105 = sphi 0, %s107
      %s108 = sphi 0, %s105
      %s109 = sphi 0, %s108
      %s125 = sphi 0, %s109
      %s133 = sphi 0, %s135
      %s136 = sphi 0, %s133
      %s137 = sphi 0, %s136
      %s153 = sphi 0, %s137
    $region4: #{tpu_custom_call.1} parent=1 // loop_header_branch
      %21 = sbr.rel (%p19) target = $region8
    $region5: #{tpu_custom_call.1} parent=1 // loop_body
      %s23 = ssub.s32 %s18, 1
      %s24 = ssub.s32 %s18, 2
      %s34 = sadd.s32 1, %s27
      %p35 = scmp.ge.s32.totalorder %s34, 1
      %s36 = scalar_select %p35, 0, %s34
      %s37 = sadd.s32 1, %s26
      %s38 = scalar_select %p35, %s37, %s26
      %p39 = scmp.ge.s32.totalorder %s38, 1
      %s40 = scalar_select %p39, 0, %s38
      %s41 = sadd.s32 1, %s25
      %s42 = scalar_select %p39, %s41, %s25
      %p43 = scmp.ge.s32.totalorder %s42, 2
      %s44 = scalar_select %p43, 0, %s42
      %s45 = ssub.s32 %s25, %s44
      %s46 = ssub.s32 %s26, %s40
      %s47 = sor.u32 %s45, %s46
      %p48 = scmp.eq.s32.totalorder %s47, 0
      %s50 = sadd.s32 %s49, 1
      %s51 = scalar_select %p48, %s49, %s50
      %p54 = pneg %p48
      %p55 = scmp.eq.s32.totalorder %s18, 1
      %p56 = por %p54, %p55
      %p57 = scmp.ne.s32.totalorder %s49, %s52
      %p58 = scmp.eq.s32.totalorder %s18, 0
      %p59 = por %p57, %p58
      %p60 = scmp.ne.s32.totalorder %s49, %s52
      %p61 = scmp.eq.s32.totalorder %s23, 1
      %p62 = por %p60, %p61
      %p63 = scmp.ne.s32.totalorder %s52, %s53
      %p64 = scmp.eq.s32.totalorder %s23, 0
      %p65 = por %p63, %p64
      %p66 = scmp.ne.s32.totalorder %s52, %s53
      %p67 = scmp.eq.s32.totalorder %s24, 1
      %p68 = por %p66, %p67
      %p70 = scmp.ne.s32.totalorder %s53, %s69
      %p71 = scmp.eq.s32.totalorder %s24, 0
      %p72 = por %p70, %p71
      %s73 = ssub.s32 %s25, %s44
      %s74 = ssub.s32 %s27, %s36
      %s75 = sor.u32 %s73, %s74
      %p76 = scmp.eq.s32.totalorder %s75, 0
      %s78 = sadd.s32 %s77, 1
      %s79 = scalar_select %p76, %s77, %s78
      %p82 = pneg %p76
      %p83 = scmp.eq.s32.totalorder %s18, 1
      %p84 = por %p82, %p83
      %p85 = scmp.ne.s32.totalorder %s77, %s80
      %p86 = scmp.eq.s32.totalorder %s18, 0
      %p87 = por %p85, %p86
      %p88 = scmp.ne.s32.totalorder %s77, %s80
      %p89 = scmp.eq.s32.totalorder %s23, 1
      %p90 = por %p88, %p89
      %p91 = scmp.ne.s32.totalorder %s80, %s81
      %p92 = scmp.eq.s32.totalorder %s23, 0
      %p93 = por %p91, %p92
      %p94 = scmp.ne.s32.totalorder %s80, %s81
      %p95 = scmp.eq.s32.totalorder %s24, 1
      %p96 = por %p94, %p95
      %p98 = scmp.ne.s32.totalorder %s81, %s97
      %p99 = scmp.eq.s32.totalorder %s24, 0
      %p100 = por %p98, %p99
      %s101 = ssub.s32 %s25, %s44
      %s102 = ssub.s32 %s27, %s36
      %s103 = sor.u32 %s101, %s102
      %p104 = scmp.eq.s32.totalorder %s103, 0
      %s106 = sadd.s32 %s105, 1
      %s107 = scalar_select %p104, %s105, %s106
      %p110 = pneg %p104
      %p111 = scmp.eq.s32.totalorder %s18, 1
      %p112 = por %p110, %p111
      %p113 = scmp.ne.s32.totalorder %s105, %s108
      %p114 = scmp.eq.s32.totalorder %s18, 0
      %p115 = por %p113, %p114
      %p116 = scmp.ne.s32.totalorder %s105, %s108
      %p117 = scmp.eq.s32.totalorder %s23, 1
      %p118 = por %p116, %p117
      %p119 = scmp.ne.s32.totalorder %s108, %s109
      %p120 = scmp.eq.s32.totalorder %s23, 0
      %p121 = por %p119, %p120
      %p122 = scmp.ne.s32.totalorder %s108, %s109
      %p123 = scmp.eq.s32.totalorder %s24, 1
      %p124 = por %p122, %p123
      %p126 = scmp.ne.s32.totalorder %s109, %s125
      %p127 = scmp.eq.s32.totalorder %s24, 0
      %p128 = por %p126, %p127
      %s129 = ssub.s32 %s25, %s44
      %s130 = ssub.s32 %s26, %s40
      %s131 = sor.u32 %s129, %s130
      %p132 = scmp.eq.s32.totalorder %s131, 0
      %s134 = sadd.s32 %s133, 1
      %s135 = scalar_select %p132, %s133, %s134
      %p138 = pneg %p132
      %p139 = scmp.eq.s32.totalorder %s18, 1
      %p140 = por %p138, %p139
      %p141 = scmp.ne.s32.totalorder %s133, %s136
      %p142 = scmp.eq.s32.totalorder %s18, 0
      %p143 = por %p141, %p142
      %p144 = scmp.ne.s32.totalorder %s133, %s136
      %p145 = scmp.eq.s32.totalorder %s23, 1
      %p146 = por %p144, %p145
      %p147 = scmp.ne.s32.totalorder %s136, %s137
      %p148 = scmp.eq.s32.totalorder %s23, 0
      %p149 = por %p147, %p148
      %p150 = scmp.ne.s32.totalorder %s136, %s137
      %p151 = scmp.eq.s32.totalorder %s24, 1
      %p152 = por %p150, %p151
      %p154 = scmp.ne.s32.totalorder %s137, %s153
      %p155 = scmp.eq.s32.totalorder %s24, 0
      %p156 = por %p154, %p155
      %p157 = scmp.le.s32.totalorder 1, %s18
      %p158 = scmp.lt.s32.totalorder %s18, 3
      %p159 = pnand %p157, %p158
      %p160 = pneg %p159
      // Predicated region
      $region9: #{tpu_custom_call.1} parent=5 // pred_check
        _
      $region10: #{tpu_custom_call.1} parent=5 // pred_check_branch
        %162 = sbr.rel (%p159) target = $region12
      $region11: #{tpu_custom_call.1} parent=5 // pred_region
        %s163 = ssub.s32 %s18, 1
      $region12: #{tpu_custom_call.1} parent=5 // pred_fallthru
        _
      %p164 = scmp.lt.s32.totalorder %s18, 2
      // Predicated region
      $region13: #{tpu_custom_call.1} parent=5 // pred_check
        %p165 = pneg %p164
      $region14: #{tpu_custom_call.1} parent=5 // pred_check_branch
        %167 = sbr.rel (%p165) target = $region16
      $region15: #{tpu_custom_call.1} parent=5 // pred_region
        // Predicated region
        $region17: #{tpu_custom_call.1} parent=15 // pred_check
          %p168 = pneg %p59
        $region18: #{tpu_custom_call.1} parent=15 // pred_check_branch
          %170 = sbr.rel (%p168) target = $region20
        $region19: #{tpu_custom_call.1} parent=15 // pred_region
          %s171 = sand.u32 %s49, 1
          %s172 = scalar_lea.sflag [#allocation7], %s171
          %s173 = sand.u32 %s49, 1
          %s174 = smul.addr %s173, 8
          %s175 = scalar_lea.vmem [#allocation6], %s174
          %177 = vsyncadd %s172, 0
          %s178 = sadd.s32 %s26, %s25
          %s179 = smul.addr %s178, 8
          %s180 = scalar_lea.hbm %s0, %s179
          %s182 = sshll.u32 %s180, 4
          %s183 = int_to_ptr.hbm [resolvable:$true] %s182
          %s184 = sshll.u32 %s175, 4
          %s185 = int_to_ptr.vmem [resolvable:$true] %s184
          %187 = dma.hbm_to_vmem [thread:$0]  %s183, 128, %s185, %s172
        $region20: #{tpu_custom_call.1} parent=15 // pred_fallthru
          _
        // Predicated region
        $region21: #{tpu_custom_call.1} parent=15 // pred_check
          %p188 = pneg %p87
        $region22: #{tpu_custom_call.1} parent=15 // pred_check_branch
          %190 = sbr.rel (%p188) target = $region24
        $region23: #{tpu_custom_call.1} parent=15 // pred_region
          %s191 = sand.u32 %s18, 1
          %s192 = scalar_lea.sflag [#allocation10], %s191
          %s193 = sand.u32 %s77, 1
          %s194 = smul.addr %s193, 8
          %s195 = scalar_lea.vmem [#allocation9], %s194
          %197 = vsyncadd %s192, 0
          %s198 = sadd.s32 %s27, %s25
          %s199 = smul.addr %s198, 8
          %s200 = scalar_lea.hbm %s1, %s199
          %s202 = sshll.u32 %s200, 4
          %s203 = int_to_ptr.hbm [resolvable:$true] %s202
          %s204 = sshll.u32 %s195, 4
          %s205 = int_to_ptr.vmem [resolvable:$true] %s204
          %207 = dma.hbm_to_vmem [thread:$0]  %s203, 128, %s205, %s192
        $region24: #{tpu_custom_call.1} parent=15 // pred_fallthru
          _
        // Predicated region
        $region25: #{tpu_custom_call.1} parent=15 // pred_check
          %p208 = pneg %p115
        $region26: #{tpu_custom_call.1} parent=15 // pred_check_branch
          %210 = sbr.rel (%p208) target = $region28
        $region27: #{tpu_custom_call.1} parent=15 // pred_region
          %s211 = sand.u32 %s18, 1
          %s212 = scalar_lea.sflag [#allocation10], %s211
          %s213 = sand.u32 %s105, 1
          %s214 = smul.addr %s213, 8
          %s215 = scalar_lea.vmem [#allocation11], %s214
          %217 = vsyncadd %s212, 0
          %s218 = sadd.s32 %s27, %s25
          %s219 = smul.addr %s218, 8
          %s220 = scalar_lea.hbm %s2, %s219
          %s222 = sshll.u32 %s220, 4
          %s223 = int_to_ptr.hbm [resolvable:$true] %s222
          %s224 = sshll.u32 %s215, 4
          %s225 = int_to_ptr.vmem [resolvable:$true] %s224
          %227 = dma.hbm_to_vmem [thread:$0]  %s223, 128, %s225, %s212
        $region28: #{tpu_custom_call.1} parent=15 // pred_fallthru
          _
      $region16: #{tpu_custom_call.1} parent=5 // pred_fallthru
        _
      %p228 = scmp.le.s32.totalorder 1, %s18
      %p229 = scmp.lt.s32.totalorder %s18, 3
      %p230 = pnand %p228, %p229
      %p231 = pneg %p230
      // Predicated region
      $region29: #{tpu_custom_call.1} parent=5 // pred_check
        _
      $region30: #{tpu_custom_call.1} parent=5 // pred_check_branch
        %233 = sbr.rel (%p230) target = $region32
      $region31: #{tpu_custom_call.1} parent=5 // pred_region
        %s234 = ssub.s32 %s18, 1
        %s235 = sand.u32 %s52, 1
        %s236 = scalar_lea.sflag [#allocation7], %s235
        %s237 = sand.u32 %s52, 1
        %s238 = smul.addr %s237, 8
        %s239 = scalar_lea.vmem [#allocation6], %s238
        // Predicated region
        $region33: #{tpu_custom_call.1} parent=31 // pred_check
          %p240 = pneg %p65
        $region34: #{tpu_custom_call.1} parent=31 // pred_check_branch
          %242 = sbr.rel (%p240) target = $region36
        $region35: #{tpu_custom_call.1} parent=31 // pred_region
          %244 = dma.done %s236, 128
        $region36: #{tpu_custom_call.1} parent=31 // pred_fallthru
          _
        %s245 = sand.u32 %s23, 1
        %s246 = scalar_lea.sflag [#allocation10], %s245
        %s247 = sand.u32 %s80, 1
        %s248 = smul.addr %s247, 8
        %s249 = scalar_lea.vmem [#allocation9], %s248
        // Predicated region
        $region37: #{tpu_custom_call.1} parent=31 // pred_check
          %p250 = pneg %p93
        $region38: #{tpu_custom_call.1} parent=31 // pred_check_branch
          %252 = sbr.rel (%p250) target = $region40
        $region39: #{tpu_custom_call.1} parent=31 // pred_region
          %254 = dma.done %s246, 128
        $region40: #{tpu_custom_call.1} parent=31 // pred_fallthru
          _
        %s255 = sand.u32 %s23, 1
        %s256 = scalar_lea.sflag [#allocation10], %s255
        %s257 = sand.u32 %s108, 1
        %s258 = smul.addr %s257, 8
        %s259 = scalar_lea.vmem [#allocation11], %s258
        // Predicated region
        $region41: #{tpu_custom_call.1} parent=31 // pred_check
          %p260 = pneg %p121
        $region42: #{tpu_custom_call.1} parent=31 // pred_check_branch
          %262 = sbr.rel (%p260) target = $region44
        $region43: #{tpu_custom_call.1} parent=31 // pred_region
          %264 = dma.done %s256, 128
        $region44: #{tpu_custom_call.1} parent=31 // pred_fallthru
          _
        %s265 = sand.u32 %s52, 1
        %s266 = scalar_lea.sflag [#allocation7], %s265
        %s267 = sand.u32 %s52, 1
        %s268 = smul.addr %s267, 8
        %s269 = scalar_lea.vmem [#allocation6], %s268
        %p270 = pneg %p65
        %p271 = pneg %p62
        %s272 = sand.u32 %s23, 1
        %s273 = scalar_lea.sflag [#allocation10], %s272
        %s274 = sand.u32 %s80, 1
        %s275 = smul.addr %s274, 8
        %s276 = scalar_lea.vmem [#allocation9], %s275
        %p277 = pneg %p93
        %p278 = pneg %p90
        %s279 = sand.u32 %s23, 1
        %s280 = scalar_lea.sflag [#allocation10], %s279
        %s281 = sand.u32 %s108, 1
        %s282 = smul.addr %s281, 8
        %s283 = scalar_lea.vmem [#allocation11], %s282
        %p284 = pneg %p121
        %p285 = pneg %p118
        %p286 = pneg %p149
        %p287 = pneg %p146
        %s288 = sand.u32 %s136, 1
        %s289 = scalar_lea.sflag [#allocation8], %s288
        %s290 = sand.u32 %s136, 1
        %s291 = smul.addr %s290, 8
        %s292 = scalar_lea.vmem [#allocation12], %s291
        %p293 = scmp.eq.s32.totalorder %s30, 0
        // Predicated region
        $region45: #{tpu_custom_call.1} parent=31 // pred_check
          %p294 = pneg %p293
        $region46: #{tpu_custom_call.1} parent=31 // pred_check_branch
          %296 = sbr.rel (%p294) target = $region48
        $region47: #{tpu_custom_call.1} parent=31 // pred_region
          %vm297 = vcmask 7168
          %298 = vst.msk [vmem:[#allocation2] sm:$0xff] %vm297, -1e+30
          %299 = vst.msk [vmem:[#allocation3] sm:$0xff] %vm297, 0.0
          %vm300 = vcmask 261120
          %301 = vst.msk [vmem:[#allocation4] sm:$0xff] %vm300, 0.0
          %v302 = vld [vmem:[%s239] sm:$0xff]
          %v303 = vmul.f32 %v302, 0.17677669
          %304 = vst.msk [vmem:[#allocation5] sm:$0xff] %vm300, %v303
        $region48: #{tpu_custom_call.1} parent=31 // pred_fallthru
          _
        %v305 = vld [vmem:[#allocation5] sm:$0xff]
        %v306 = vld [vmem:[%s249] sm:$0xff]
        %v307 = vld [vmem:[%s259] sm:$0xff]
        %vm308 = vcmask 261120
        %v310 = vsel %vm308, %v305, 0
        %v313 = vsel %vm308, %v306, 0
        %315 = vmatpush.xpose.msra.mxu0 0.0
        %316 = vmatpush.xpose.msra.mxu0 0.0
        %317 = vmatpush.xpose.msra.mxu0 0.0
        %318 = vmatpush.xpose.msra.mxu0 0.0
        %319 = vmatpush.xpose.msra.mxu0 0.0
        %320 = vmatpush.xpose.msra.mxu0 0.0
        %321 = vmatpush.xpose.msra.mxu0 0.0
        %322 = vmatpush.xpose.msra.mxu0 0.0
        %323 = vmatpush.xpose.msra.mxu0 0.0
        %324 = vmatpush.xpose.msra.mxu0 0.0
        %325 = vmatpush.xpose.msra.mxu0 0.0
        %326 = vmatpush.xpose.msra.mxu0 0.0
        %327 = vmatpush.xpose.msra.mxu0 0.0
        %328 = vmatpush.xpose.msra.mxu0 0.0
        %329 = vmatpush.xpose.msra.mxu0 0.0
        %330 = vmatpush.xpose.msra.mxu0 %v313
        %331 = vmatmul.f32.gmra.mxu0 %v310
        %v332 = vpop.f32.mrf.mxu0
        %v333 = vadd.f32 0.0, %v332
        %334 = vdwg.mxu0
        %v335 = vld [vmem:[#allocation2] sm:$0xff]
        %vm336 = vcmask 64512
        %v337 = vsel %vm336, %v333, -inf
        %338 = vmax.xlane.f32.xlu0 %v337
        %v339 = vpop.xlane.xlu0 %338
        %v340 = vmax.f32 %v335, %v339
        %v341 = vsub.f32 %v335, %v340
        %v342 = vmul.f32 %v341, 1.442695
        %v343 = vpow.pop %v342
        %345 = vset.pattern.permute.xlu0 0
        %346 = vperm.xlu0 %345, %v340
        %v347 = vpop.permute.xlu0 %346
        %v349 = vsub.f32 %v333, %v347
        %v350 = vmul.f32 %v349, 1.442695
        %v351 = vpow.pop %v350
        %v352 = vld [vmem:[#allocation3] sm:$0xff]
        %v353 = vmul.f32 %v343, %v352
        %v354 = vsel %vm336, %v351, 0.0
        %355 = vadd.xlane.f32.xlu0 %v354
        %v356 = vpop.xlane.xlu0 %355
        %v357 = vadd.f32 %v353, %v356
        %vm358 = vcmask 7168
        %359 = vst.msk [vmem:[#allocation3] sm:$0xff] %vm358, %v357
        %v360 = vld [vmem:[#allocation4] sm:$0xff]
        %362 = vset.pattern.permute.xlu0 0
        %363 = vperm.xlu0 %362, %v343
        %v364 = vpop.permute.xlu0 %363
        %v366 = vmul.f32 %v364, %v360
        %v368 = vsel %vm336, %v351, 0
        %370 = vmatpush.msra.mxu0 0.0
        %371 = vmatpush.msra.mxu0 0.0
        %372 = vmatpush.msra.mxu0 0.0
        %373 = vmatpush.msra.mxu0 0.0
        %374 = vmatpush.msra.mxu0 0.0
        %375 = vmatpush.msra.mxu0 0.0
        %376 = vmatpush.msra.mxu0 0.0
        %377 = vmatpush.msra.mxu0 0.0
        %378 = vmatpush.msra.mxu0 0.0
        %379 = vmatpush.msra.mxu0 0.0
        %380 = vmatpush.msra.mxu0 0.0
        %381 = vmatpush.msra.mxu0 0.0
        %382 = vmatpush.msra.mxu0 0.0
        %383 = vmatpush.msra.mxu0 0.0
        %384 = vmatpush.msra.mxu0 0.0
        %385 = vmatpush.msra.mxu0 %v307
        %386 = vmatmul.f32.gmra.mxu0 %v368
        %v387 = vpop.f32.mrf.mxu0
        %v388 = vadd.f32 0.0, %v387
        %389 = vdwg.mxu0
        %v390 = vadd.f32 %v366, %v388
        %391 = vst.msk [vmem:[#allocation4] sm:$0xff] %vm308, %v390
        %392 = vst.msk [vmem:[#allocation2] sm:$0xff] %vm358, %v340
        // Predicated region
        $region49: #{tpu_custom_call.1} parent=31 // pred_check
          %p393 = pneg %p293
        $region50: #{tpu_custom_call.1} parent=31 // pred_check_branch
          %395 = sbr.rel (%p393) target = $region52
        $region51: #{tpu_custom_call.1} parent=31 // pred_region
          %v396 = vld [vmem:[#allocation3] sm:$0xff]
          %v397 = vrcp.pop %v396
          %v398 = vmul.f32 %v396, %v397
          %v399 = vsub.f32 1.0, %v398
          %v400 = vmul.f32 %v397, %v399
          %v401 = vadd.f32 %v397, %v400
          %vm402 = vweird.f32 %v396
          %vm403 = vweird.f32 %v397
          %vm404 = vmor %vm402, %vm403
          %v405 = vsel %vm404, %v397, %v401
          %v406 = vand.u32 2147483647, %v396
          %vm407 = vcmp.eq.f32.partialorder %v406, 8.507059e+37
          %v408 = vand.u32 %v396, 2147483648
          %v409 = vor.u32 1.1754944e-38, %v408
          %v410 = vsel %vm407, %v409, %v405
          %v411 = vld [vmem:[#allocation4] sm:$0xff]
          %413 = vset.pattern.permute.xlu0 0
          %414 = vperm.xlu0 %413, %v410
          %v415 = vpop.permute.xlu0 %414
          %v417 = vmul.f32 %v411, %v415
          %418 = vst.msk [vmem:[%s292] sm:$0xff] %vm308, %v417
        $region52: #{tpu_custom_call.1} parent=31 // pred_fallthru
          _
        %s419 = sand.u32 %s136, 1
        %s420 = scalar_lea.sflag [#allocation8], %s419
        %s421 = sand.u32 %s136, 1
        %s422 = smul.addr %s421, 8
        %s423 = scalar_lea.vmem [#allocation12], %s422
        // Predicated region
        $region53: #{tpu_custom_call.1} parent=31 // pred_check
          %p424 = pneg %p146
        $region54: #{tpu_custom_call.1} parent=31 // pred_check_branch
          %426 = sbr.rel (%p424) target = $region56
        $region55: #{tpu_custom_call.1} parent=31 // pred_region
          %428 = vsyncadd %s420, 0
          %s429 = sadd.s32 %s29, %s28
          %s430 = smul.addr %s429, 8
          %s431 = scalar_lea.hbm %s3, %s430
          %s433 = sshll.u32 %s423, 4
          %s434 = int_to_ptr.vmem [resolvable:$true] %s433
          %s435 = sshll.u32 %s431, 4
          %s436 = int_to_ptr.hbm [resolvable:$true] %s435
          %438 = dma.vmem_to_hbm [thread:$0]  %s434, 128, %s436, %s420
        $region56: #{tpu_custom_call.1} parent=31 // pred_fallthru
          _
      $region32: #{tpu_custom_call.1} parent=5 // pred_fallthru
        _
      %p439 = scmp.le.s32.totalorder 2, %s18
      // Predicated region
      $region57: #{tpu_custom_call.1} parent=5 // pred_check
        %p440 = pneg %p439
      $region58: #{tpu_custom_call.1} parent=5 // pred_check_branch
        %442 = sbr.rel (%p440) target = $region60
      $region59: #{tpu_custom_call.1} parent=5 // pred_region
        %s443 = ssub.s32 %s18, 2
        // Predicated region
        $region61: #{tpu_custom_call.1} parent=59 // pred_check
          %p444 = pneg %p152
        $region62: #{tpu_custom_call.1} parent=59 // pred_check_branch
          %446 = sbr.rel (%p444) target = $region64
        $region63: #{tpu_custom_call.1} parent=59 // pred_region
          %s447 = sand.u32 %s137, 1
          %s448 = scalar_lea.sflag [#allocation8], %s447
          %s449 = sand.u32 %s137, 1
          %s450 = smul.addr %s449, 8
          %s451 = scalar_lea.vmem [#allocation12], %s450
          %453 = dma.done %s448, 128
        $region64: #{tpu_custom_call.1} parent=59 // pred_fallthru
          _
      $region60: #{tpu_custom_call.1} parent=5 // pred_fallthru
        _
    $region6: #{tpu_custom_call.1} parent=1 // loop_footer
      %s22 = sadd.s32 1, %s18
    $region7: #{tpu_custom_call.1} parent=1 // loop_footer_branch
      %17 = sbr.rel target = $region3
    $region8: #{tpu_custom_call.1} parent=1 // loop_exit
      _
    %454 = vsyncpa [#allocation7], 1
    %s455 = scalar_lea.sflag [#allocation7], 1
    %456 = vsyncpa %s455, 1
    %457 = vsyncpa [#allocation10], 1
    %s458 = scalar_lea.sflag [#allocation10], 1
    %459 = vsyncpa %s458, 1
    %460 = vsyncpa [#allocation8], 1
    %s461 = scalar_lea.sflag [#allocation8], 1
    %462 = vsyncpa %s461, 1

</llo_original>
